<compile_context>
chip_gen: v6e
topology: v6e:2x2x1
jax: 0.10.0
libtpu: 0.0.40
codegen_flags: <defaults>
</compile_context>

<pallas_src>
import functools

import jax
import jax.numpy as jnp
import numpy as np
from jax.experimental import pallas as pl
from jax.experimental.pallas import tpu as pltpu

VMEM_LIMIT = 32 * 1024 * 1024
_F32 = jnp.float32
_BF16 = jnp.bfloat16


def _round_up(x, m):
    return (x + m - 1) // m * m


def _const_spec(shape):
    zeros = (0,) * len(shape)
    return pl.BlockSpec(tuple(shape), lambda *_: zeros)


def _pick_row_tile(n, row_tile):
    return row_tile if n >= row_tile else _round_up(n, 8)


# ----------------------------------------------------------------------------
# Kernel 1: per-channel row statistics (mean / unbiased std) over the row axis.
# ----------------------------------------------------------------------------
def _row_stats_kernel(x_ref, mean_ref, std_ref, sum_ref, ssq_ref, *, n_rows, eps):
    i = pl.program_id(0)

    @pl.when(i == 0)
    def _init():
        sum_ref[...] = jnp.zeros_like(sum_ref)
        ssq_ref[...] = jnp.zeros_like(ssq_ref)

    x = x_ref[...]
    sum_ref[...] += jnp.sum(x, axis=0, keepdims=True)
    ssq_ref[...] += jnp.sum(x * x, axis=0, keepdims=True)

    @pl.when(i == pl.num_programs(0) - 1)
    def _finalize():
        mean = sum_ref[...] * (1.0 / n_rows)
        denom = n_rows - 1 if n_rows > 1 else 1
        var = (ssq_ref[...] - n_rows * mean * mean) * (1.0 / denom)
        var = jnp.maximum(var, 0.0)
        mean_ref[...] = mean
        std_ref[...] = jnp.sqrt(var + eps)


def row_stats(x, *, eps=1e-5, row_tile=256):
    """x: [M, C] -> (mean [1, C], std [1, C]); reduction over rows."""
    x = x.astype(_F32)
    n, c = x.shape
    tm = _pick_row_tile(n, row_tile)
    npad = _round_up(n, tm)
    if npad != n:
        x = jnp.pad(x, ((0, npad - n), (0, 0)))  # zero rows do not affect sums
    kernel = functools.partial(_row_stats_kernel, n_rows=n, eps=eps)
    return pl.pallas_call(
        kernel,
        out_shape=(jax.ShapeDtypeStruct((1, c), _F32),
                   jax.ShapeDtypeStruct((1, c), _F32)),
        grid=(npad // tm,),
        in_specs=[pl.BlockSpec((tm, c), lambda i: (i, 0))],
        out_specs=(pl.BlockSpec((1, c), lambda i: (0, 0)),
                   pl.BlockSpec((1, c), lambda i: (0, 0))),
        scratch_shapes=[pltpu.VMEM((1, c), _F32), pltpu.VMEM((1, c), _F32)],
        compiler_params=pltpu.CompilerParams(
            dimension_semantics=("arbitrary",), vmem_limit_bytes=VMEM_LIMIT),
    )(x)


# ----------------------------------------------------------------------------
# Kernel 2: fused style branch: stats + normalize + 3x(3x3 conv) + gram matrix.
# Convolutions are 9 shifted-tap matmuls on a padded VMEM-resident activation.
# ----------------------------------------------------------------------------
def _style_kernel(s_ref, mask_ref, w1_ref, b1_ref, w2_ref, b2_ref, w3_ref, b3_ref,
                  smean_ref, sstd_ref, gram_ref,
                  pad1_ref, pad2_ref, pad3_ref, *, H, W, pad_rows, eps):
    HW = H * W
    s = s_ref[...]                                          # [HW, C] f32
    mean = jnp.sum(s, axis=0, keepdims=True) * (1.0 / HW)
    d = s - mean
    denom = HW - 1 if HW > 1 else 1
    var = jnp.sum(d * d, axis=0, keepdims=True) * (1.0 / denom)
    std = jnp.sqrt(var + eps)
    smean_ref[...] = mean
    sstd_ref[...] = std
    xn = d * (1.0 / std)                                    # normalized style

    offsets = [(oh, ow) for oh in (-1, 0, 1) for ow in (-1, 0, 1)]

    def conv3x3(pad_ref, x, w_ref, b_ref, relu):
        cout = w_ref.shape[-1]
        pad_ref[...] = jnp.zeros_like(pad_ref)
        pad_ref[pad_rows:pad_rows + HW, :] = x
        acc = jnp.zeros((HW, cout), _F32)
        for t, (oh, ow) in enumerate(offsets):
            start = pad_rows + oh * W + ow
            tap = pad_ref[start:start + HW, :] * mask_ref[t]    # zero-padded tap
            acc = acc + jnp.dot(tap.astype(_BF16), w_ref[t],
                                preferred_element_type=_F32)
        acc = acc + b_ref[...]
        if relu:
            acc = jnp.maximum(acc, 0.0)
        return acc

    a1 = conv3x3(pad1_ref, xn, w1_ref, b1_ref, True)        # [HW, 128]
    a2 = conv3x3(pad2_ref, a1, w2_ref, b2_ref, True)        # [HW, 64]
    a3 = conv3x3(pad3_ref, a2, w3_ref, b3_ref, False)       # [HW, D]
    gram_ref[...] = jnp.dot(a3.T, a3, preferred_element_type=_F32) * (1.0 / HW)


def _conv_masks(H, W):
    hh, ww = np.meshgrid(np.arange(H), np.arange(W), indexing="ij")
    masks = []
    for oh in (-1, 0, 1):
        for ow in (-1, 0, 1):
            valid = ((hh + oh >= 0) & (hh + oh < H) &
                     (ww + ow >= 0) & (ww + ow < W))
            masks.append(valid.reshape(H * W, 1))
    return jnp.asarray(np.stack(masks, 0).astype(np.float32))     # [9, HW, 1]


def style_branch(s_hwc, prep, H, W, *, eps=1e-5):
    HW, C = s_hwc.shape
    D = prep["c3_w"].shape[-1]
    c2_in = prep["c2_w"].shape[1]
    c3_in = prep["c3_w"].shape[1]
    pad_rows = _round_up(W + 1, 8)
    hwp = HW + 2 * pad_rows
    masks = _conv_masks(H, W)
    kernel = functools.partial(_style_kernel, H=H, W=W, pad_rows=pad_rows, eps=eps)
    args = (s_hwc, masks, prep["c1_w"], prep["c1_b"], prep["c2_w"], prep["c2_b"],
            prep["c3_w"], prep["c3_b"])
    smean, sstd, gram = pl.pallas_call(
        kernel,
        out_shape=(jax.ShapeDtypeStruct((1, C), _F32),
                   jax.ShapeDtypeStruct((1, C), _F32),
                   jax.ShapeDtypeStruct((D, D), _F32)),
        grid=(1,),
        in_specs=[_const_spec(a.shape) for a in args],
        out_specs=(_const_spec((1, C)), _const_spec((1, C)), _const_spec((D, D))),
        scratch_shapes=[pltpu.VMEM((hwp, C), _F32),
                        pltpu.VMEM((hwp, c2_in), _F32),
                        pltpu.VMEM((hwp, c3_in), _F32)],
        compiler_params=pltpu.CompilerParams(
            dimension_semantics=("arbitrary",), vmem_limit_bytes=VMEM_LIMIT),
    )(*args)
    return smean, sstd, gram


# ----------------------------------------------------------------------------
# Kernel 3: fc layer with the bf16 weight streamed over a K-chunk grid axis.
# ----------------------------------------------------------------------------
def _fc_kernel(g_ref, w_ref, b_ref, o_ref):
    @pl.when(pl.program_id(0) == 0)
    def _init():
        o_ref[...] = b_ref[...]

    o_ref[...] += jnp.dot(g_ref[...].astype(_BF16), w_ref[...],
                          preferred_element_type=_F32)


def fc_apply(g_flat, w_t, b, *, k_chunk=256):
    """g_flat: [1, K], w_t: [K, O] (bf16, pre-transposed), b: [1, O] -> [1, O]."""
    g_flat = g_flat.astype(_F32)
    _, K = g_flat.shape
    O = w_t.shape[1]
    if K % k_chunk != 0:
        k_chunk = K
    return pl.pallas_call(
        _fc_kernel,
        out_shape=jax.ShapeDtypeStruct((1, O), _F32),
        grid=(K // k_chunk,),
        in_specs=[pl.BlockSpec((1, k_chunk), lambda k: (0, k)),
                  pl.BlockSpec((k_chunk, O), lambda k: (k, 0)),
                  pl.BlockSpec((1, O), lambda k: (0, 0))],
        out_specs=pl.BlockSpec((1, O), lambda k: (0, 0)),
        compiler_params=pltpu.CompilerParams(
            dimension_semantics=("arbitrary",), vmem_limit_bytes=VMEM_LIMIT),
    )(g_flat, w_t, b)


# ----------------------------------------------------------------------------
# Kernel 4: fused content path: normalize -> compress -> sMatrix -> unzip -> affine.
# ----------------------------------------------------------------------------
def _content_kernel(cf_ref, cm_ref, cs_ref, sm_ref, ss_ref, mt_ref,
                    w1_ref, b1_ref, w2_ref, b2_ref, w3_ref, b3_ref,
                    w4_ref, b4_ref, o_ref):
    x = cf_ref[...]                                                  # [tm, C]
    xn = (x - cm_ref[...]) * (1.0 / cs_ref[...])
    h = jnp.dot(xn.astype(_BF16), w1_ref[...], preferred_element_type=_F32)
    h = jnp.maximum(h + b1_ref[...], 0.0)                            # [tm, 128]
    comp = jnp.dot(h.astype(_BF16), w2_ref[...],
                   preferred_element_type=_F32) + b2_ref[...]        # [tm, D]
    tfeat = jnp.dot(comp.astype(_BF16), mt_ref[...],
                    preferred_element_type=_F32)                     # [tm, D]
    h2 = jnp.dot(tfeat.astype(_BF16), w3_ref[...], preferred_element_type=_F32)
    h2 = jnp.maximum(h2 + b3_ref[...], 0.0)                          # [tm, 128]
    y = jnp.dot(h2.astype(_BF16), w4_ref[...],
                preferred_element_type=_F32) + b4_ref[...]           # [tm, C]
    o_ref[...] = y * ss_ref[...] + sm_ref[...]


def content_transform(cF, c_mean, c_std, s_mean, s_std, smat_t, prep, *, row_tile=256):
    cF = cF.astype(_F32)
    n, c = cF.shape
    tm = _pick_row_tile(n, row_tile)
    npad = _round_up(n, tm)
    if npad != n:
        cF = jnp.pad(cF, ((0, npad - n), (0, 0)))
    consts = (c_mean, c_std, s_mean, s_std, smat_t,
              prep["comp_w1"], prep["comp_b1"], prep["comp_w2"], prep["comp_b2"],
              prep["uz_w1"], prep["uz_b1"], prep["uz_w2"], prep["uz_b2"])
    out = pl.pallas_call(
        _content_kernel,
        out_shape=jax.ShapeDtypeStruct((npad, c), _F32),
        grid=(npad // tm,),
        in_specs=[pl.BlockSpec((tm, c), lambda i: (i, 0))]
        + [_const_spec(a.shape) for a in consts],
        out_specs=pl.BlockSpec((tm, c), lambda i: (i, 0)),
        compiler_params=pltpu.CompilerParams(
            dimension_semantics=("parallel",), vmem_limit_bytes=VMEM_LIMIT),
    )(cF, *consts)
    return out[:n] if npad != n else out


def _adain_kernel(cf_ref, cm_ref, cs_ref, sm_ref, ss_ref, o_ref):
    xn = (cf_ref[...] - cm_ref[...]) * (1.0 / cs_ref[...])
    o_ref[...] = xn * ss_ref[...] + sm_ref[...]


def adain_transform(cF, c_mean, c_std, s_mean, s_std, *, row_tile=256):
    cF = cF.astype(_F32)
    n, c = cF.shape
    tm = _pick_row_tile(n, row_tile)
    npad = _round_up(n, tm)
    if npad != n:
        cF = jnp.pad(cF, ((0, npad - n), (0, 0)))
    consts = (c_mean, c_std, s_mean, s_std)
    out = pl.pallas_call(
        _adain_kernel,
        out_shape=jax.ShapeDtypeStruct((npad, c), _F32),
        grid=(npad // tm,),
        in_specs=[pl.BlockSpec((tm, c), lambda i: (i, 0))]
        + [_const_spec(a.shape) for a in consts],
        out_specs=pl.BlockSpec((tm, c), lambda i: (i, 0)),
        compiler_params=pltpu.CompilerParams(
            dimension_semantics=("parallel",), vmem_limit_bytes=VMEM_LIMIT),
    )(cF, *consts)
    return out[:n] if npad != n else out


# ----------------------------------------------------------------------------
# MulLayer forward
# ----------------------------------------------------------------------------
def mul_layer_forward(prep, cF, sF, *, trans=True, adain=False, eps=1e-5,
                      row_tile=256):
    """cF: [N, C] point features, sF: [1, C, H, W] style features -> [N, C]."""
    N, C = cF.shape
    B, C2, H, W = sF.shape
    assert B == 1 and C == C2

    # one-time layout conversion: channels on lanes, pixels/points on rows
    s_hwc = jnp.transpose(sF[0], (1, 2, 0)).reshape(H * W, C).astype(_F32)

    c_mean, c_std = row_stats(cF, eps=eps, row_tile=row_tile)

    if adain:
        s_mean, s_std = row_stats(s_hwc, eps=eps, row_tile=row_tile)
        return adain_transform(cF, c_mean, c_std, s_mean, s_std, row_tile=row_tile)

    if not trans:
        # TODO(synk): trans=False branch broadcasts [N,256] with [256,1] in the
        # reference, which is ill-formed; intentionally not implemented.
        raise NotImplementedError("trans=False branch is ill-formed in the reference")

    D = prep["c3_w"].shape[-1]
    s_mean, s_std, gram = style_branch(s_hwc, prep, H, W, eps=eps)
    smat_flat = fc_apply(gram.reshape(1, D * D), prep["fc_wT"], prep["fc_b"])
    smat_t = smat_flat.reshape(D, D).T.astype(_BF16)   # sMatrix^T (tiny, wrapper-side)
    return content_transform(cF, c_mean, c_std, s_mean, s_std, smat_t, prep,
                             row_tile=row_tile)


# ----------------------------------------------------------------------------
# Parameters: torch-layout init + one-time preparation (transpose / bf16 cast).
# ----------------------------------------------------------------------------
def init_params(key, matrix_size=32, C=256):
    D = matrix_size
    shapes = {
        "comp_w1": (128, C), "comp_b1": (128,),
        "comp_w2": (D, 128), "comp_b2": (D,),
        "uz_w1": (128, D), "uz_b1": (128,),
        "uz_w2": (C, 128), "uz_b2": (C,),
        "c1_w": (128, C, 3, 3), "c1_b": (128,),
        "c2_w": (64, 128, 3, 3), "c2_b": (64,),
        "c3_w": (D, 64, 3, 3), "c3_b": (D,),
        "fc_w": (D * D, D * D), "fc_b": (D * D,),
    }
    keys = jax.random.split(key, len(shapes))
    params = {}
    for (name, shape), k in zip(shapes.items(), keys):
        scale = 0.05 if name.endswith("_w") else 0.01
        params[name] = scale * jax.random.normal(k, shape, _F32)
    return params


def prepare_params(params):
    """Hoisted, one-time weight layout transforms (transposes, tap ordering, bf16)."""
    def lin_w(w):  # nn.Linear weight [out, in] -> [in, out] bf16
        return jnp.asarray(w).T.astype(_BF16)

    def vec(b):    # bias -> [1, out] f32
        return jnp.asarray(b).reshape(1, -1).astype(_F32)

    def conv_w(w):  # [Cout, Cin, 3, 3] -> [9(tap=kh*3+kw), Cin, Cout] bf16
        co, ci, kh, kw = w.shape
        return jnp.transpose(w, (2, 3, 1, 0)).reshape(kh * kw, ci, co).astype(_BF16)

    return {
        "comp_w1": lin_w(params["comp_w1"]), "comp_b1": vec(params["comp_b1"]),
        "comp_w2": lin_w(params["comp_w2"]), "comp_b2": vec(params["comp_b2"]),
        "uz_w1": lin_w(params["uz_w1"]), "uz_b1": vec(params["uz_b1"]),
        "uz_w2": lin_w(params["uz_w2"]), "uz_b2": vec(params["uz_b2"]),
        "c1_w": conv_w(params["c1_w"]), "c1_b": vec(params["c1_b"]),
        "c2_w": conv_w(params["c2_w"]), "c2_b": vec(params["c2_b"]),
        "c3_w": conv_w(params["c3_w"]), "c3_b": vec(params["c3_b"]),
        "fc_wT": jnp.asarray(params["fc_w"]).T.astype(_BF16),
        "fc_b": vec(params["fc_b"]),
    }


# ----------------------------------------------------------------------------
if __name__ == "__main__":
    key = jax.random.PRNGKey(0)
    N, C, H, W, D = 64, 256, 8, 8, 32

    k_c, k_s, k_p = jax.random.split(key, 3)
    cF = jax.random.normal(k_c, (N, C), _F32)            # point features [N, C]
    sF = jax.random.normal(k_s, (1, C, H, W), _F32)      # style image features NCHW
    params = init_params(k_p, matrix_size=D, C=C)
    prep = prepare_params(params)                        # one-time weight prep

    # full (adain=False, trans=True) path: stats + fused snet + fc + fused content chain
    out = mul_layer_forward(prep, cF, sF, trans=True, adain=False)
    # adain=True path: per-channel statistics transfer only
    out_adain = mul_layer_forward(prep, cF, sF, adain=True)

    jax.block_until_ready((out, out_adain))
    assert out.shape == (N, C) and out.dtype == _F32
    assert out_adain.shape == (N, C)
    assert bool(jnp.all(jnp.isfinite(out))) and bool(jnp.all(jnp.isfinite(out_adain)))
    print("KERNEL_OK")
</pallas_src>

<mosaic_0001>
module attributes {stable_mosaic.version = 11 : i64} {
  func.func @_row_stats_kernel(%arg0: i32, %arg1: memref<64x256xf32, #tpu.memory_space<vmem>>, %arg2: memref<1x256xf32, #tpu.memory_space<vmem>>, %arg3: memref<1x256xf32, #tpu.memory_space<vmem>>, %arg4: memref<1x256xf32, #tpu.memory_space<vmem>>, %arg5: memref<1x256xf32, #tpu.memory_space<vmem>>) attributes {dimension_semantics = [#tpu.dimension_semantics<arbitrary>], iteration_bounds = array<i64: 1>, scalar_prefetch = 0 : i64, scratch_operands = 2 : i64, tpu.core_type = #tpu.core_type<tc>, window_params = [{transform_indices = @transform_0, window_bounds = array<i64: 64, 256>}, {pipeline_mode = #tpu.pipeline_mode<synchronous>, transform_indices = @transform_1, window_bounds = array<i64: 1, 256>}, {pipeline_mode = #tpu.pipeline_mode<synchronous>, transform_indices = @transform_2, window_bounds = array<i64: 1, 256>}]} {
    %c0_i32 = arith.constant 0 : i32
    %0 = arith.cmpi eq, %arg0, %c0_i32 : i32
    %1 = arith.extui %0 : i1 to i32
    %c0_i32_0 = arith.constant 0 : i32
    %2 = arith.cmpi ne, %1, %c0_i32_0 : i32
    scf.if %2 {
      %cst_13 = arith.constant 0.000000e+00 : f32
      %18 = vector.broadcast %cst_13 : f32 to vector<1x256xf32>
      %c0_14 = arith.constant 0 : index
      %c0_15 = arith.constant 0 : index
      %19 = vector.load %arg4[%c0_14, %c0_15] : memref<1x256xf32, #tpu.memory_space<vmem>>, vector<1x256xf32>
      tpu.vector_store %arg4[%c0_14, %c0_15], %18 {strides = array<i32>} : memref<1x256xf32, #tpu.memory_space<vmem>>, vector<1x256xf32>,
      %cst_16 = arith.constant 0.000000e+00 : f32
      %20 = vector.broadcast %cst_16 : f32 to vector<1x256xf32>
      %c0_17 = arith.constant 0 : index
      %c0_18 = arith.constant 0 : index
      %21 = vector.load %arg5[%c0_17, %c0_18] : memref<1x256xf32, #tpu.memory_space<vmem>>, vector<1x256xf32>
      tpu.vector_store %arg5[%c0_17, %c0_18], %20 {strides = array<i32>} : memref<1x256xf32, #tpu.memory_space<vmem>>, vector<1x256xf32>,
    } else {
    }
    %c0 = arith.constant 0 : index
    %c0_1 = arith.constant 0 : index
    %3 = vector.load %arg1[%c0, %c0_1] : memref<64x256xf32, #tpu.memory_space<vmem>>, vector<64x256xf32>
    %c0_2 = arith.constant 0 : index
    %c0_3 = arith.constant 0 : index
    %4 = vector.load %arg4[%c0_2, %c0_3] : memref<1x256xf32, #tpu.memory_space<vmem>>, vector<1x256xf32>
    %cst = arith.constant dense<0.000000e+00> : vector<256xf32>
    %5 = vector.multi_reduction <add>, %3, %cst [0] : vector<64x256xf32> to vector<256xf32>
    %6 = vector.shape_cast %5 : vector<256xf32> to vector<1x256xf32>
    %7 = arith.addf %4, %6 : vector<1x256xf32>
    %c0_4 = arith.constant 0 : index
    %c0_5 = arith.constant 0 : index
    %8 = vector.load %arg4[%c0_4, %c0_5] : memref<1x256xf32, #tpu.memory_space<vmem>>, vector<1x256xf32>
    tpu.vector_store %arg4[%c0_4, %c0_5], %7 {strides = array<i32>} : memref<1x256xf32, #tpu.memory_space<vmem>>, vector<1x256xf32>,
    %c0_6 = arith.constant 0 : index
    %c0_7 = arith.constant 0 : index
    %9 = vector.load %arg5[%c0_6, %c0_7] : memref<1x256xf32, #tpu.memory_space<vmem>>, vector<1x256xf32>
    %10 = arith.mulf %3, %3 : vector<64x256xf32>
    %cst_8 = arith.constant dense<0.000000e+00> : vector<256xf32>
    %11 = vector.multi_reduction <add>, %10, %cst_8 [0] : vector<64x256xf32> to vector<256xf32>
    %12 = vector.shape_cast %11 : vector<256xf32> to vector<1x256xf32>
    %13 = arith.addf %9, %12 : vector<1x256xf32>
    %c0_9 = arith.constant 0 : index
    %c0_10 = arith.constant 0 : index
    %14 = vector.load %arg5[%c0_9, %c0_10] : memref<1x256xf32, #tpu.memory_space<vmem>>, vector<1x256xf32>
    tpu.vector_store %arg5[%c0_9, %c0_10], %13 {strides = array<i32>} : memref<1x256xf32, #tpu.memory_space<vmem>>, vector<1x256xf32>,
    %c0_i32_11 = arith.constant 0 : i32
    %15 = arith.cmpi eq, %arg0, %c0_i32_11 : i32
    %16 = arith.extui %15 : i1 to i32
    %c0_i32_12 = arith.constant 0 : i32
    %17 = arith.cmpi ne, %16, %c0_i32_12 : i32
    scf.if %17 {
      %c0_13 = arith.constant 0 : index
      %c0_14 = arith.constant 0 : index
      %18 = vector.load %arg4[%c0_13, %c0_14] : memref<1x256xf32, #tpu.memory_space<vmem>>, vector<1x256xf32>
      %cst_15 = arith.constant 1.562500e-02 : f32
      %19 = vector.broadcast %cst_15 : f32 to vector<1x256xf32>
      %20 = arith.mulf %18, %19 : vector<1x256xf32>
      %c0_16 = arith.constant 0 : index
      %c0_17 = arith.constant 0 : index
      %21 = vector.load %arg5[%c0_16, %c0_17] : memref<1x256xf32, #tpu.memory_space<vmem>>, vector<1x256xf32>
      %cst_18 = arith.constant 6.400000e+01 : f32
      %22 = vector.broadcast %cst_18 : f32 to vector<1x256xf32>
      %23 = arith.mulf %22, %20 : vector<1x256xf32>
      %24 = arith.mulf %23, %20 : vector<1x256xf32>
      %25 = arith.subf %21, %24 : vector<1x256xf32>
      %cst_19 = arith.constant 0.0158730168 : f32
      %26 = vector.broadcast %cst_19 : f32 to vector<1x256xf32>
      %27 = arith.mulf %25, %26 : vector<1x256xf32>
      %cst_20 = arith.constant 0.000000e+00 : f32
      %28 = vector.broadcast %cst_20 : f32 to vector<1x256xf32>
      %29 = arith.maximumf %27, %28 : vector<1x256xf32>
      %c0_21 = arith.constant 0 : index
      %c0_22 = arith.constant 0 : index
      %30 = vector.load %arg2[%c0_21, %c0_22] : memref<1x256xf32, #tpu.memory_space<vmem>>, vector<1x256xf32>
      tpu.vector_store %arg2[%c0_21, %c0_22], %20 {strides = array<i32>} : memref<1x256xf32, #tpu.memory_space<vmem>>, vector<1x256xf32>,
      %cst_23 = arith.constant 9.99999974E-6 : f32
      %31 = vector.broadcast %cst_23 : f32 to vector<1x256xf32>
      %32 = arith.addf %29, %31 : vector<1x256xf32>
      %33 = math.sqrt %32 : vector<1x256xf32>
      %c0_24 = arith.constant 0 : index
      %c0_25 = arith.constant 0 : index
      %34 = vector.load %arg3[%c0_24, %c0_25] : memref<1x256xf32, #tpu.memory_space<vmem>>, vector<1x256xf32>
      tpu.vector_store %arg3[%c0_24, %c0_25], %33 {strides = array<i32>} : memref<1x256xf32, #tpu.memory_space<vmem>>, vector<1x256xf32>,
    } else {
    }
    return
  }
  func.func @transform_0(%arg0: i32) -> (i32, i32) {
    %c0_i32 = arith.constant 0 : i32
    %c0_i32_0 = arith.constant 0 : i32
    return %arg0, %c0_i32 : i32, i32
  }
  func.func @transform_1(%arg0: i32) -> (i32, i32) {
    %c0_i32 = arith.constant 0 : i32
    %c0_i32_0 = arith.constant 0 : i32
    %c0_i32_1 = arith.constant 0 : i32
    return %c0_i32, %c0_i32_0 : i32, i32
  }
  func.func @transform_2(%arg0: i32) -> (i32, i32) {
    %c0_i32 = arith.constant 0 : i32
    %c0_i32_0 = arith.constant 0 : i32
    %c0_i32_1 = arith.constant 0 : i32
    return %c0_i32, %c0_i32_0 : i32, i32
  }
}

</mosaic_0001>

<llo_original>
// kernel: tpu_custom_call.1
$region0: #{tpu_custom_call.1}
  #allocation0 [shape = 'u32[]', space=smem, size = 0x4, offset = 0x4, fixed_abs, tag = 'smem constant byte address 0x4 - core index']
  #allocation1 [shape = 'u32[144,128]{1,0:T(1,128)}', space=vmem, size = 0x12000, scoped, tag = 'internal scratch']
  #allocation2 [shape = 'f32[1,256]{1,0:T(1,128)}', space=vmem, size = 0x400, scoped, tag = 'scratch operand']
  #allocation3 [shape = 'f32[1,256]{1,0:T(1,128)}', space=vmem, size = 0x400, scoped, tag = 'scratch operand']
  %s0 = inlined_call_operand.hbm [shape: f32[64,256], index: 0, kind: input, shape index: {}]
  %s1 = inlined_call_operand.hbm [shape: f32[1,256], index: 1, kind: output, shape index: {0}]
  %s2 = inlined_call_operand.hbm [shape: f32[1,256], index: 2, kind: output, shape index: {1}]
  %3 = xla_tuple %s1, %s2
  %s4 = sld [smem:[#allocation0]]
  $region34: #{tpu_custom_call.1} parent=0
    _
  %s6 = ssub.s32 1, %s4
  %s7 = scalar_select 0, %s6, %s4
  $region1: #{tpu_custom_call.1} parent=0
    #allocation4 [shape = 'u8[65536]{0}', space=vmem, size = 0x10000, scoped, tag = 'input window, operand 0, single buffered']
    #allocation5 [shape = 's32[1]{0}', space=sflag, size = 0x4, scoped, tag = 'scoped memory for tpu_custom_call.1']
    #allocation6 [shape = 's32[1]{0}', space=sflag, size = 0x4, scoped, tag = 'scoped memory for tpu_custom_call.1']
    #allocation7 [shape = 'u8[1024]{0}', space=vmem, size = 0x400, scoped, tag = 'output window, operand 0, single buffered']
    #allocation8 [shape = 'u8[1024]{0}', space=vmem, size = 0x400, scoped, tag = 'output window, operand 1, single buffered']
    #allocation9 [shape = 's32[1]{0}', space=sflag, size = 0x4, scoped, tag = 'scoped memory for tpu_custom_call.1']
    %8 = vsyncpa [#allocation5], 0
    %9 = vsyncpa [#allocation6], 0
    %10 = vsyncpa [#allocation9], 0
    // Predicated region
    $region2: #{tpu_custom_call.1} parent=1 // pred_check
      _
    $region3: #{tpu_custom_call.1} parent=1 // pred_check_branch
      %12 = sbr.rel (0) target = $region5
    $region4: #{tpu_custom_call.1} parent=1 // pred_region
      %s14 = ssub.s32 2048, 2048
      %15 = vsyncadd [#allocation5], %s14
      %s16 = sshll.u32 [#allocation4], 4
      %s17 = int_to_ptr.vmem [resolvable:$true] %s16
      %22 = dma.hbm_to_vmem [thread:$0]  %s0, 2048, %s17, [#allocation5], 256, 256, 16
    $region5: #{tpu_custom_call.1} parent=1 // pred_fallthru
      _
    // Predicated region
    $region6: #{tpu_custom_call.1} parent=1 // pred_check
      _
    $region7: #{tpu_custom_call.1} parent=1 // pred_check_branch
      %24 = sbr.rel (0) target = $region9
    $region8: #{tpu_custom_call.1} parent=1 // pred_region
      %25 = dma.done [#allocation5], 2048
    $region9: #{tpu_custom_call.1} parent=1 // pred_fallthru
      _
    %p26 = scmp.eq.s32.totalorder 0, 0
    // Predicated region
    $region10: #{tpu_custom_call.1} parent=1 // pred_check
      %p27 = pneg %p26
    $region11: #{tpu_custom_call.1} parent=1 // pred_check_branch
      %29 = sbr.rel (%p27) target = $region13
    $region12: #{tpu_custom_call.1} parent=1 // pred_region
      %v30 = vlaneseq
      %vm31 = vcmp.ge.s32.totalorder %v30, 0
      %vm32 = vcmp.lt.s32.totalorder %v30, 256
      %vm33 = vmand %vm31, %vm32
      %34 = vst.msk [vmem:[#allocation2] sm:$0x3] %vm33, 0.0
      %35 = vst.msk [vmem:[#allocation3] sm:$0x3] %vm33, 0.0
    $region13: #{tpu_custom_call.1} parent=1 // pred_fallthru
      _
    %v36 = vld [vmem:[#allocation4] sm:$0xff]
    %v37 = vld [vmem:[#allocation4 + $0x8] sm:$0xff]
    %v38 = vld [vmem:[#allocation4 + $0x10] sm:$0xff]
    %v39 = vld [vmem:[#allocation4 + $0x18] sm:$0xff]
    %v40 = vld [vmem:[#allocation4 + $0x20] sm:$0xff]
    %v41 = vld [vmem:[#allocation4 + $0x28] sm:$0xff]
    %v42 = vld [vmem:[#allocation4 + $0x30] sm:$0xff]
    %v43 = vld [vmem:[#allocation4 + $0x38] sm:$0xff]
    %v44 = vld [vmem:[#allocation4 + $0x40] sm:$0xff]
    %v45 = vld [vmem:[#allocation4 + $0x48] sm:$0xff]
    %v46 = vld [vmem:[#allocation4 + $0x50] sm:$0xff]
    %v47 = vld [vmem:[#allocation4 + $0x58] sm:$0xff]
    %v48 = vld [vmem:[#allocation4 + $0x60] sm:$0xff]
    %v49 = vld [vmem:[#allocation4 + $0x68] sm:$0xff]
    %v50 = vld [vmem:[#allocation4 + $0x70] sm:$0xff]
    %v51 = vld [vmem:[#allocation4 + $0x78] sm:$0xff]
    %v52 = vld [vmem:[#allocation2] sm:$0x3]
    %v53 = vadd.f32 %v36, %v38
    %v54 = vadd.f32 %v53, %v40
    %v55 = vadd.f32 %v54, %v42
    %v56 = vadd.f32 %v55, %v44
    %v57 = vadd.f32 %v56, %v46
    %v58 = vadd.f32 %v57, %v48
    %v59 = vadd.f32 %v58, %v50
    %v60 = vrot.slane %v59, 4
    %v61 = vadd.f32 %v59, %v60
    %v62 = vrot.slane %v61, 2
    %v63 = vadd.f32 %v61, %v62
    %v64 = vrot.slane %v63, 1
    %v65 = vadd.f32 %v63, %v64
    %v66 = vadd.f32 %v37, %v39
    %v67 = vadd.f32 %v66, %v41
    %v68 = vadd.f32 %v67, %v43
    %v69 = vadd.f32 %v68, %v45
    %v70 = vadd.f32 %v69, %v47
    %v71 = vadd.f32 %v70, %v49
    %v72 = vadd.f32 %v71, %v51
    %v73 = vrot.slane %v72, 4
    %v74 = vadd.f32 %v72, %v73
    %v75 = vrot.slane %v74, 2
    %v76 = vadd.f32 %v74, %v75
    %v77 = vrot.slane %v76, 1
    %v78 = vadd.f32 %v76, %v77
    %v81 = vcombine.low %v65, %v78
    %v83 = vunpack.c.l.s4 1966171168
    %v84 = vunpack.c.0.s8 %v83
    %v85 = vlaneseq
    %v86 = vshrl.u32 %v85, 7
    %v87 = vsub.s32 %v84, %v86
    %v88 = vrot.slane %v81, %v87
    %v90 = vunpack.c.l.s4 1966171168
    %v91 = vunpack.c.0.s8 %v90
    %v92 = vlaneseq
    %v93 = vshrl.u32 %v92, 7
    %v94 = vsub.s32 %v91, %v93
    %v95 = vrot.slane %v88, %v94
    %v97 = vadd.f32 %v52, %v95
    %v98 = vlaneseq
    %vm99 = vcmp.ge.s32.totalorder %v98, 0
    %vm100 = vcmp.lt.s32.totalorder %v98, 256
    %vm101 = vmand %vm99, %vm100
    %102 = vst.msk [vmem:[#allocation2] sm:$0x3] %vm101, %v97
    %v103 = vld [vmem:[#allocation3] sm:$0x3]
    %v104 = vmul.f32 %v36, %v36
    %v105 = vmul.f32 %v37, %v37
    %v106 = vmul.f32 %v38, %v38
    %v107 = vmul.f32 %v39, %v39
    %v108 = vmul.f32 %v40, %v40
    %v109 = vmul.f32 %v41, %v41
    %v110 = vmul.f32 %v42, %v42
    %v111 = vmul.f32 %v43, %v43
    %v112 = vmul.f32 %v44, %v44
    %v113 = vmul.f32 %v45, %v45
    %v114 = vmul.f32 %v46, %v46
    %v115 = vmul.f32 %v47, %v47
    %v116 = vmul.f32 %v48, %v48
    %v117 = vmul.f32 %v49, %v49
    %v118 = vmul.f32 %v50, %v50
    %v119 = vmul.f32 %v51, %v51
    %v120 = vadd.f32 %v104, %v106
    %v121 = vadd.f32 %v120, %v108
    %v122 = vadd.f32 %v121, %v110
    %v123 = vadd.f32 %v122, %v112
    %v124 = vadd.f32 %v123, %v114
    %v125 = vadd.f32 %v124, %v116
    %v126 = vadd.f32 %v125, %v118
    %v127 = vrot.slane %v126, 4
    %v128 = vadd.f32 %v126, %v127
    %v129 = vrot.slane %v128, 2
    %v130 = vadd.f32 %v128, %v129
    %v131 = vrot.slane %v130, 1
    %v132 = vadd.f32 %v130, %v131
    %v133 = vadd.f32 %v105, %v107
    %v134 = vadd.f32 %v133, %v109
    %v135 = vadd.f32 %v134, %v111
    %v136 = vadd.f32 %v135, %v113
    %v137 = vadd.f32 %v136, %v115
    %v138 = vadd.f32 %v137, %v117
    %v139 = vadd.f32 %v138, %v119
    %v140 = vrot.slane %v139, 4
    %v141 = vadd.f32 %v139, %v140
    %v142 = vrot.slane %v141, 2
    %v143 = vadd.f32 %v141, %v142
    %v144 = vrot.slane %v143, 1
    %v145 = vadd.f32 %v143, %v144
    %v148 = vcombine.low %v132, %v145
    %v150 = vunpack.c.l.s4 1966171168
    %v151 = vunpack.c.0.s8 %v150
    %v152 = vlaneseq
    %v153 = vshrl.u32 %v152, 7
    %v154 = vsub.s32 %v151, %v153
    %v155 = vrot.slane %v148, %v154
    %v157 = vunpack.c.l.s4 1966171168
    %v158 = vunpack.c.0.s8 %v157
    %v159 = vlaneseq
    %v160 = vshrl.u32 %v159, 7
    %v161 = vsub.s32 %v158, %v160
    %v162 = vrot.slane %v155, %v161
    %v164 = vadd.f32 %v103, %v162
    %165 = vst.msk [vmem:[#allocation3] sm:$0x3] %vm101, %v164
    // Predicated region
    $region14: #{tpu_custom_call.1} parent=1 // pred_check
      %p166 = pneg %p26
    $region15: #{tpu_custom_call.1} parent=1 // pred_check_branch
      %168 = sbr.rel (%p166) target = $region17
    $region16: #{tpu_custom_call.1} parent=1 // pred_region
      %v169 = vld [vmem:[#allocation2] sm:$0x3]
      %v170 = vmul.f32 %v169, 0.015625
      %v171 = vld [vmem:[#allocation3] sm:$0x3]
      %v172 = vmul.f32 %v170, 64.0
      %v173 = vmul.f32 %v172, %v170
      %v174 = vsub.f32 %v171, %v173
      %v175 = vmul.f32 %v174, 0.015873017
      %v176 = vmax.f32 %v175, 0.0
      %177 = vst.msk [vmem:[#allocation7] sm:$0x3] %vm101, %v170
      %v178 = vadd.f32 %v176, 1e-05
      %v179 = vrsqrt.pop %v178
      %v180 = vmul.f32 %v178, %v179
      %vm181 = vcmp.eq.f32.partialorder %v178, inf
      %v182 = vsel %vm181, %v178, %v180
      %vm183 = vcmp.eq.f32.partialorder %v178, 0.0
      %v184 = vand.u32 %v178, 2147483648
      %v185 = vsel %vm183, %v184, %v182
      %186 = vst.msk [vmem:[#allocation8] sm:$0x3] %vm101, %v185
    $region17: #{tpu_custom_call.1} parent=1 // pred_fallthru
      _
    // Predicated region
    $region18: #{tpu_custom_call.1} parent=1 // pred_check
      _
    $region19: #{tpu_custom_call.1} parent=1 // pred_check_branch
      %188 = sbr.rel (0) target = $region21
    $region20: #{tpu_custom_call.1} parent=1 // pred_region
      %s190 = ssub.s32 32, 32
      %191 = vsyncadd [#allocation6], %s190
      %s193 = sshll.u32 [#allocation7], 4
      %s194 = int_to_ptr.vmem [resolvable:$true] %s193
      %196 = dma.vmem_to_hbm [thread:$0]  %s194, 32, %s1, [#allocation6]
    $region21: #{tpu_custom_call.1} parent=1 // pred_fallthru
      _
    // Predicated region
    $region22: #{tpu_custom_call.1} parent=1 // pred_check
      _
    $region23: #{tpu_custom_call.1} parent=1 // pred_check_branch
      %198 = sbr.rel (0) target = $region25
    $region24: #{tpu_custom_call.1} parent=1 // pred_region
      %s200 = ssub.s32 32, 32
      %201 = vsyncadd [#allocation9], %s200
      %s203 = sshll.u32 [#allocation8], 4
      %s204 = int_to_ptr.vmem [resolvable:$true] %s203
      %206 = dma.vmem_to_hbm [thread:$0]  %s204, 32, %s2, [#allocation9]
    $region25: #{tpu_custom_call.1} parent=1 // pred_fallthru
      _
    // Predicated region
    $region26: #{tpu_custom_call.1} parent=1 // pred_check
      _
    $region27: #{tpu_custom_call.1} parent=1 // pred_check_branch
      %208 = sbr.rel (0) target = $region29
    $region28: #{tpu_custom_call.1} parent=1 // pred_region
      %209 = dma.done [#allocation6], 32
    $region29: #{tpu_custom_call.1} parent=1 // pred_fallthru
      _
    // Predicated region
    $region30: #{tpu_custom_call.1} parent=1 // pred_check
      _
    $region31: #{tpu_custom_call.1} parent=1 // pred_check_branch
      %211 = sbr.rel (0) target = $region33
    $region32: #{tpu_custom_call.1} parent=1 // pred_region
      %212 = dma.done [#allocation9], 32
    $region33: #{tpu_custom_call.1} parent=1 // pred_fallthru
      _
    %213 = vsyncpa [#allocation5], 1
    %214 = vsyncpa [#allocation6], 1
    %215 = vsyncpa [#allocation9], 1

</llo_original>
